<compile_context>
chip_gen: v7x
topology: tpu7x:2x2x1
jax: 0.10.0
libtpu: 0.0.40
codegen_flags: <defaults>
</compile_context>

<pallas_src>
import functools

import jax
import jax.numpy as jnp
from jax.experimental import pallas as pl
from jax.experimental.pallas import tpu as pltpu


# ----------------------------------------------------------------------------
# Kernels
# ----------------------------------------------------------------------------
def _reduce_scatter_tiled_kernel(x_ref, o_ref):
    # x_ref: (W, 1, chunk, tile_d) -- dest-rank i's chunk from EVERY contributing rank
    # o_ref: (chunk, tile_d)       -- dest-rank i's output tile (leading dim squeezed)
    # Unrolled per-rank accumulate: exactly one (chunk, tile_d) f32 slab live,
    # W loads + 1 store per output vreg, no whole-block f32 temporary.
    W = x_ref.shape[0]
    acc = x_ref[0, 0].astype(jnp.float32)
    for r in range(1, W):  # W is a small static constant -> unrolled
        acc = acc + x_ref[r, 0].astype(jnp.float32)
    o_ref[...] = acc.astype(o_ref.dtype)


def _reduce_scatter_whole_kernel(x_ref, o_ref):
    # Grid-less path for small problems.
    # x_ref: (W, W, chunk, D) -- x reshaped in the wrapper (contiguous, free)
    # o_ref: (W, chunk, D)
    W = x_ref.shape[0]
    acc = x_ref[0].astype(jnp.float32)
    for r in range(1, W):
        acc = acc + x_ref[r].astype(jnp.float32)
    o_ref[...] = acc.astype(o_ref.dtype)


# ----------------------------------------------------------------------------
# Generation-aware VMEM budgets
# ----------------------------------------------------------------------------
@functools.lru_cache(maxsize=None)
def _vmem_budgets():
    try:
        cap = int(pltpu.get_tpu_info().vmem_capacity_bytes)
    except Exception:
        cap = 64 * 1024 * 1024  # conservative (v7x-sized) fallback
    tile_budget = cap // 2        # per-step double-buffered blocks + f32 acc
    vmem_limit = (cap * 3) // 4   # headroom below physical VMEM
    single_max = cap // 16        # whole-problem grid-less threshold
    return tile_budget, vmem_limit, single_max


# ----------------------------------------------------------------------------
# Tile selection
# ----------------------------------------------------------------------------
def _lane_divisors(d_pad):
    return [t for t in range(128, d_pad + 1, 128) if d_pad % t == 0]


def _choose_tile_d(W, chunk, d_pad, itemsize, budget_bytes, lane_floor):
    """Largest multiple-of-128 divisor of d_pad whose per-step VMEM footprint
    (double-buffered input + double-buffered output + live f32 accumulator)
    fits the budget; never below the dtype-aware DMA-row floor if avoidable."""
    divisors = _lane_divisors(d_pad)
    per_d = (2 * W * chunk * itemsize   # double-buffered input block
             + 2 * chunk * itemsize     # double-buffered output block
             + chunk * 4)               # live f32 accumulator
    max_tile = max(128, (budget_bytes // max(per_d, 1)) // 128 * 128)
    fitting = [t for t in divisors if t <= max_tile]
    best = max(fitting) if fitting else divisors[0]
    if best < lane_floor:
        bigger = [t for t in divisors if t >= lane_floor]
        if bigger:
            best = min(bigger)  # prefer >= ~1 KiB contiguous DMA rows
    return best


def _split_for_min_steps(d_pad, tile_d, W, lane_floor, min_steps=4):
    """Shrink tile_d (not below lane_floor) until the grid has >= min_steps
    steps, so both v7x TensorCores get pipelined work."""
    if W * (d_pad // tile_d) >= min_steps:
        return tile_d
    for t in sorted(_lane_divisors(d_pad), reverse=True):
        if t > tile_d or t < lane_floor:
            continue
        if W * (d_pad // t) >= min_steps:
            return t
    return tile_d


# ----------------------------------------------------------------------------
# Wrapper
# ----------------------------------------------------------------------------
def dist_reduce_scatter_tensor(x, *, use_single=None, tile_d=None):
    """Simulated reduce_scatter_tensor (sum).

    Args:
      x: [W, W*CHUNK, D] array; x[r] is rank r's local input tensor.
      use_single: force (True) / forbid (False) the grid-less path; None = auto.
      tile_d: optional explicit lane-tile size for the tiled path.
    Returns:
      (x, output) where output[r] = sum_{r'} x[r', r*CHUNK:(r+1)*CHUNK, :].
    """
    W, total, D = x.shape
    if total % W != 0:
        raise ValueError("second dim of x must be divisible by world size W")
    chunk = total // W
    itemsize = jnp.dtype(x.dtype).itemsize
    tile_budget, vmem_limit, single_max = _vmem_budgets()

    # Free, contiguous reshape: chunk becomes a FULL-extent dim, so neither path
    # needs any chunk % sublane alignment.
    x4 = x.reshape(W, W, chunk, D)

    # Whole-problem VMEM footprint incl. the f32 accumulator.
    footprint = (x.size + W * chunk * D) * itemsize + W * chunk * D * 4
    if use_single is None:
        use_single = footprint <= single_max

    if use_single:
        # Small problem: one grid-less call, zero per-step pipeline overhead.
        output = pl.pallas_call(
            _reduce_scatter_whole_kernel,
            out_shape=jax.ShapeDtypeStruct((W, chunk, D), x.dtype),
            compiler_params=pltpu.CompilerParams(vmem_limit_bytes=vmem_limit),
        )(x4)
        return x, output

    # ---------------- general tiled path ----------------
    # Pad the lane (hidden) dim to a multiple of 128 -> unmasked lane-dense vst;
    # the pad (zeros) is sliced off afterwards.
    d_pad = max(128, -(-D // 128) * 128)
    if d_pad != D:
        x4 = jnp.pad(x4, ((0, 0), (0, 0), (0, 0), (0, d_pad - D)))

    lane_floor = min({4: 128, 2: 256, 1: 512}.get(itemsize, 128), d_pad)
    if tile_d is None:
        tile_d = _choose_tile_d(W, chunk, d_pad, itemsize, tile_budget, lane_floor)
        tile_d = _split_for_min_steps(d_pad, tile_d, W, lane_floor, min_steps=4)
    if d_pad % tile_d != 0 or tile_d % 128 != 0:
        raise ValueError(f"tile_d={tile_d} must be a multiple of 128 dividing {d_pad}")

    grid = (W, d_pad // tile_d)  # (dest rank, lane tile) -- both fully parallel

    out_padded = pl.pallas_call(
        _reduce_scatter_tiled_kernel,
        out_shape=jax.ShapeDtypeStruct((W, chunk, d_pad), x.dtype),
        grid=grid,
        in_specs=[
            # All W contributing ranks' chunk for dest rank `i`, lane tile `d`.
            pl.BlockSpec((W, 1, chunk, tile_d), lambda i, d: (0, i, 0, d)),
        ],
        out_specs=pl.BlockSpec(
            (pl.Squeezed(), chunk, tile_d), lambda i, d: (i, 0, d)),
        compiler_params=pltpu.CompilerParams(
            dimension_semantics=("parallel", "parallel"),
            vmem_limit_bytes=vmem_limit,
        ),
    )(x4)

    output = out_padded[:, :, :D] if d_pad != D else out_padded
    # Module returns x (output is the side-effect buffer); return both.
    return x, output


# ----------------------------------------------------------------------------
# Self-test
# ----------------------------------------------------------------------------
if __name__ == "__main__":
    key = jax.random.PRNGKey(0)
    k1, k2, k3, k4 = jax.random.split(key, 4)

    # Test 1: tiny shape (world 4, per-rank chunk 8, hidden 128) -> grid-less path.
    W, CHUNK, D = 4, 8, 128
    x1 = jax.random.normal(k1, (W, W * CHUNK, D), dtype=jnp.float32)
    x_out1, out1 = dist_reduce_scatter_tensor(x1)
    jax.block_until_ready((x_out1, out1))
    ref1 = jnp.sum(x1, axis=0).reshape(W, CHUNK, D)
    assert x_out1.shape == x1.shape and jnp.array_equal(x_out1, x1)
    assert out1.shape == (W, CHUNK, D)
    assert jnp.allclose(out1, ref1, atol=1e-5, rtol=1e-5)

    # Test 2: exercise the general tiled path (grid over dest rank AND lane tiles).
    W2, CHUNK2, D2 = 4, 8, 256
    x2 = jax.random.normal(k2, (W2, W2 * CHUNK2, D2), dtype=jnp.float32)
    x_out2, out2 = dist_reduce_scatter_tensor(x2, use_single=False, tile_d=128)
    jax.block_until_ready((x_out2, out2))
    ref2 = jnp.sum(x2, axis=0).reshape(W2, CHUNK2, D2)
    assert jnp.array_equal(x_out2, x2)
    assert jnp.allclose(out2, ref2, atol=1e-5, rtol=1e-5)

    # Test 3: bf16 through the tiled path (per-rank f32 accumulate, cast once).
    W3, CHUNK3, D3 = 2, 16, 128
    x3 = jax.random.normal(k3, (W3, W3 * CHUNK3, D3), dtype=jnp.float32).astype(jnp.bfloat16)
    x_out3, out3 = dist_reduce_scatter_tensor(x3, use_single=False)
    jax.block_until_ready((x_out3, out3))
    ref3 = jnp.sum(x3.astype(jnp.float32), axis=0).reshape(W3, CHUNK3, D3).astype(jnp.bfloat16)
    assert out3.dtype == jnp.bfloat16
    assert jnp.allclose(out3.astype(jnp.float32), ref3.astype(jnp.float32),
                        atol=2e-2, rtol=2e-2)

    # Test 4: unaligned chunk (12 % 8 != 0) and unaligned hidden (160 % 128 != 0):
    # exercises lane padding + full-extent chunk blocks in the tiled path.
    W4, CHUNK4, D4 = 2, 12, 160
    x4_ = jax.random.normal(k4, (W4, W4 * CHUNK4, D4), dtype=jnp.float32)
    x_out4, out4 = dist_reduce_scatter_tensor(x4_, use_single=False)
    jax.block_until_ready((x_out4, out4))
    ref4 = jnp.sum(x4_, axis=0).reshape(W4, CHUNK4, D4)
    assert jnp.array_equal(x_out4, x4_)
    assert out4.shape == (W4, CHUNK4, D4)
    assert jnp.allclose(out4, ref4, atol=1e-5, rtol=1e-5)

    print("KERNEL_OK")
</pallas_src>

<mosaic_0001>
module attributes {stable_mosaic.version = 11 : i64} {
  func.func @_reduce_scatter_whole_kernel(%arg0: memref<4x4x8x128xf32, #tpu.memory_space<vmem>>, %arg1: memref<4x8x128xf32, #tpu.memory_space<vmem>>) attributes {dimension_semantics = [], scalar_prefetch = 0 : i64, scratch_operands = 0 : i64, tpu.core_type = #tpu.core_type<tc>} {
    %c0 = arith.constant 0 : index
    %c0_0 = arith.constant 0 : index
    %c0_1 = arith.constant 0 : index
    %c0_2 = arith.constant 0 : index
    %0 = vector.load %arg0[%c0, %c0_0, %c0_1, %c0_2] : memref<4x4x8x128xf32, #tpu.memory_space<vmem>>, vector<1x4x8x128xf32>
    %1 = vector.shape_cast %0 : vector<1x4x8x128xf32> to vector<4x8x128xf32>
    %c1 = arith.constant 1 : index
    %c0_3 = arith.constant 0 : index
    %c0_4 = arith.constant 0 : index
    %c0_5 = arith.constant 0 : index
    %2 = vector.load %arg0[%c1, %c0_3, %c0_4, %c0_5] : memref<4x4x8x128xf32, #tpu.memory_space<vmem>>, vector<1x4x8x128xf32>
    %3 = vector.shape_cast %2 : vector<1x4x8x128xf32> to vector<4x8x128xf32>
    %4 = arith.addf %1, %3 : vector<4x8x128xf32>
    %c2 = arith.constant 2 : index
    %c0_6 = arith.constant 0 : index
    %c0_7 = arith.constant 0 : index
    %c0_8 = arith.constant 0 : index
    %5 = vector.load %arg0[%c2, %c0_6, %c0_7, %c0_8] : memref<4x4x8x128xf32, #tpu.memory_space<vmem>>, vector<1x4x8x128xf32>
    %6 = vector.shape_cast %5 : vector<1x4x8x128xf32> to vector<4x8x128xf32>
    %7 = arith.addf %4, %6 : vector<4x8x128xf32>
    %c3 = arith.constant 3 : index
    %c0_9 = arith.constant 0 : index
    %c0_10 = arith.constant 0 : index
    %c0_11 = arith.constant 0 : index
    %8 = vector.load %arg0[%c3, %c0_9, %c0_10, %c0_11] : memref<4x4x8x128xf32, #tpu.memory_space<vmem>>, vector<1x4x8x128xf32>
    %9 = vector.shape_cast %8 : vector<1x4x8x128xf32> to vector<4x8x128xf32>
    %10 = arith.addf %7, %9 : vector<4x8x128xf32>
    %c0_12 = arith.constant 0 : index
    %c0_13 = arith.constant 0 : index
    %c0_14 = arith.constant 0 : index
    %11 = vector.load %arg1[%c0_12, %c0_13, %c0_14] : memref<4x8x128xf32, #tpu.memory_space<vmem>>, vector<4x8x128xf32>
    tpu.vector_store %arg1[%c0_12, %c0_13, %c0_14], %10 {strides = array<i32>} : memref<4x8x128xf32, #tpu.memory_space<vmem>>, vector<4x8x128xf32>,
    return
  }
}

</mosaic_0001>

<llo_original>
// kernel: tpu_custom_call.1
$region0: #{tpu_custom_call.1}
  #allocation0 [shape = 'u32[]', space=smem, size = 0x4, offset = 0x4, fixed_abs, tag = 'smem constant byte address 0x4 - core index']
  #allocation1 [shape = 'u32[144,128]{1,0:T(1,128)}', space=vmem, size = 0x12000, scoped, tag = 'internal scratch']
  %s0 = inlined_call_operand.hbm [shape: f32[4,4,8,128], index: 0, kind: input, shape index: {}]
  %s1 = inlined_call_operand.hbm [shape: f32[4,8,128], index: 1, kind: output, shape index: {}]
  %s2 = sld [smem:[#allocation0]]
  $region18: #{tpu_custom_call.1} parent=0
    _
  %s4 = ssub.s32 1, %s2
  %s5 = scalar_select 0, %s4, %s2
  $region1: #{tpu_custom_call.1} parent=0
    #allocation2 [shape = 'u8[65536]{0}', space=vmem, size = 0x10000, scoped, tag = 'input window, operand 0, single buffered']
    #allocation3 [shape = 's32[1]{0}', space=sflag, size = 0x4, scoped, tag = 'scoped memory for tpu_custom_call.1']
    #allocation4 [shape = 's32[1]{0}', space=sflag, size = 0x4, scoped, tag = 'scoped memory for tpu_custom_call.1']
    #allocation5 [shape = 'u8[16384]{0}', space=vmem, size = 0x4000, scoped, tag = 'output window, operand 0, single buffered']
    %6 = vsyncpa [#allocation3], 0
    %7 = vsyncpa [#allocation4], 0
    // Predicated region
    $region2: #{tpu_custom_call.1} parent=1 // pred_check
      _
    $region3: #{tpu_custom_call.1} parent=1 // pred_check_branch
      %9 = sbr.rel (0) target = $region5
    $region4: #{tpu_custom_call.1} parent=1 // pred_region
      %s11 = ssub.s32 2048, 2048
      %12 = vsyncadd [#allocation3], %s11
      %s13 = sshll.u32 [#allocation2], 4
      %s14 = int_to_ptr.vmem [resolvable:$true] %s13
      %19 = dma.hbm_to_vmem [thread:$0]  %s0, 2048, %s14, [#allocation3], 128, 128, 8
    $region5: #{tpu_custom_call.1} parent=1 // pred_fallthru
      _
    // Predicated region
    $region6: #{tpu_custom_call.1} parent=1 // pred_check
      _
    $region7: #{tpu_custom_call.1} parent=1 // pred_check_branch
      %21 = sbr.rel (0) target = $region9
    $region8: #{tpu_custom_call.1} parent=1 // pred_region
      %22 = dma.done [#allocation3], 2048
    $region9: #{tpu_custom_call.1} parent=1 // pred_fallthru
      _
    %v23 = vld [vmem:[#allocation2] sm:$0xff]
    %v24 = vld [vmem:[#allocation2 + $0x8] sm:$0xff]
    %v25 = vld [vmem:[#allocation2 + $0x10] sm:$0xff]
    %v26 = vld [vmem:[#allocation2 + $0x18] sm:$0xff]
    %s27 = scalar_lea.vmem [#allocation2], 32
    %v28 = vld [vmem:[%s27] sm:$0xff]
    %v29 = vld [vmem:[%s27 + $0x8] sm:$0xff]
    %v30 = vld [vmem:[%s27 + $0x10] sm:$0xff]
    %v31 = vld [vmem:[%s27 + $0x18] sm:$0xff]
    %v32 = vadd.f32 %v23, %v28
    %v33 = vadd.f32 %v24, %v29
    %v34 = vadd.f32 %v25, %v30
    %v35 = vadd.f32 %v26, %v31
    %s36 = scalar_lea.vmem [#allocation2], 64
    %v37 = vld [vmem:[%s36] sm:$0xff]
    %v38 = vld [vmem:[%s36 + $0x8] sm:$0xff]
    %v39 = vld [vmem:[%s36 + $0x10] sm:$0xff]
    %v40 = vld [vmem:[%s36 + $0x18] sm:$0xff]
    %v41 = vadd.f32 %v32, %v37
    %v42 = vadd.f32 %v33, %v38
    %v43 = vadd.f32 %v34, %v39
    %v44 = vadd.f32 %v35, %v40
    %s45 = scalar_lea.vmem [#allocation2], 96
    %v46 = vld [vmem:[%s45] sm:$0xff]
    %v47 = vld [vmem:[%s45 + $0x8] sm:$0xff]
    %v48 = vld [vmem:[%s45 + $0x10] sm:$0xff]
    %v49 = vld [vmem:[%s45 + $0x18] sm:$0xff]
    %v50 = vadd.f32 %v41, %v46
    %v51 = vadd.f32 %v42, %v47
    %v52 = vadd.f32 %v43, %v48
    %v53 = vadd.f32 %v44, %v49
    %54 = vst [vmem:[#allocation5] sm:$0xff] %v50
    %55 = vst [vmem:[#allocation5 + $0x8] sm:$0xff] %v51
    %56 = vst [vmem:[#allocation5 + $0x10] sm:$0xff] %v52
    %57 = vst [vmem:[#allocation5 + $0x18] sm:$0xff] %v53
    // Predicated region
    $region10: #{tpu_custom_call.1} parent=1 // pred_check
      _
    $region11: #{tpu_custom_call.1} parent=1 // pred_check_branch
      %59 = sbr.rel (0) target = $region13
    $region12: #{tpu_custom_call.1} parent=1 // pred_region
      %s61 = ssub.s32 512, 512
      %62 = vsyncadd [#allocation4], %s61
      %s63 = sshll.u32 [#allocation5], 4
      %s64 = int_to_ptr.vmem [resolvable:$true] %s63
      %69 = dma.vmem_to_hbm [thread:$0]  %s64, 512, %s1, [#allocation4], 128, 128, 8
    $region13: #{tpu_custom_call.1} parent=1 // pred_fallthru
      _
    // Predicated region
    $region14: #{tpu_custom_call.1} parent=1 // pred_check
      _
    $region15: #{tpu_custom_call.1} parent=1 // pred_check_branch
      %71 = sbr.rel (0) target = $region17
    $region16: #{tpu_custom_call.1} parent=1 // pred_region
      %72 = dma.done [#allocation4], 512
    $region17: #{tpu_custom_call.1} parent=1 // pred_fallthru
      _
    %73 = vsyncpa [#allocation3], 1
    %74 = vsyncpa [#allocation4], 1

</llo_original>
